<compile_context>
chip_gen: v5e
topology: v5e:2x2
jax: 0.10.0
libtpu: 0.0.40
codegen_flags: <defaults>
</compile_context>

<pallas_src>
import functools
import numpy as np
import jax
import jax.numpy as jnp
from jax import lax
from jax.experimental import pallas as pl
from jax.experimental.pallas import tpu as pltpu


_LANE = 128
_SUBLANE = 8
_MAX_TF = 2048                          # lane-tile cap (multiple of 128)
_VMEM_TILE_BUDGET = 12 * 1024 * 1024    # per-grid-step working-set target
_VMEM_LIMIT = 32 * 1024 * 1024          # explicit scoped-VMEM limit (safe on v5e/v6e/v7x)


def _train_fused_kernel(x_ref, y_ref, mean_ref):
    """Training, whole batch resident per tile: mean + rotation in one pass."""
    x = x_ref[...].astype(jnp.float32)                       # (B, TF) f32 in-kernel
    mean = jnp.sum(x, axis=0, keepdims=True) * (1.0 / x.shape[0])
    mean_ref[...] = mean
    a = jnp.clip(2.0 * x - 1.0, -1.0, 1.0)                   # cos(x_ancle)
    m = jnp.clip(2.0 * mean - 1.0, -1.0, 1.0)                 # cos(x_mean_ancle)
    # rote = pi/2 - acos(m)  =>  cos(rote) = sqrt(1 - m^2), sin(rote) = m
    cos_rote = jnp.sqrt(jnp.maximum(1.0 - m * m, 0.0))
    sin_ancle = jnp.sqrt(jnp.maximum(1.0 - a * a, 0.0))
    cos_final = a * cos_rote - sin_ancle * m                  # cos(acos(a) + rote)
    y_ref[...] = ((cos_final + 1.0) * 0.5).astype(y_ref.dtype)


def _mean_kernel(x_ref, mean_ref, *, batch_size, batch_tile):
    """Training phase 1 (large batch): accumulate per-feature mean over batch tiles."""
    j = pl.program_id(1)

    @pl.when(j == 0)
    def _():
        mean_ref[...] = jnp.zeros_like(mean_ref)

    x = x_ref[...].astype(jnp.float32)                        # (TB, TF)
    row = lax.broadcasted_iota(jnp.int32, x.shape, 0) + j * batch_tile
    x = jnp.where(row < batch_size, x, 0.0)                   # mask ragged batch tail
    mean_ref[...] += jnp.sum(x, axis=0, keepdims=True)

    @pl.when(j == pl.num_programs(1) - 1)
    def _():
        mean_ref[...] *= (1.0 / batch_size)


def _apply_train_kernel(x_ref, mean_ref, y_ref):
    """Training phase 2 (large batch): rotate every angle by the per-feature mean angle."""
    x = x_ref[...].astype(jnp.float32)
    m = jnp.clip(2.0 * mean_ref[...] - 1.0, -1.0, 1.0)        # (1, TF)
    cos_rote = jnp.sqrt(jnp.maximum(1.0 - m * m, 0.0))
    a = jnp.clip(2.0 * x - 1.0, -1.0, 1.0)
    sin_ancle = jnp.sqrt(jnp.maximum(1.0 - a * a, 0.0))
    cos_final = a * cos_rote - sin_ancle * m
    y_ref[...] = ((cos_final + 1.0) * 0.5).astype(y_ref.dtype)


def _eval_kernel(x_ref, cr_ref, sr_ref, y_ref):
    """Eval: rotate by the running rotation (cos/sin precomputed in the wrapper)."""
    x = x_ref[...].astype(jnp.float32)
    a = jnp.clip(2.0 * x - 1.0, -1.0, 1.0)
    sin_ancle = jnp.sqrt(jnp.maximum(1.0 - a * a, 0.0))
    cos_final = a * cr_ref[...] - sin_ancle * sr_ref[...]
    y_ref[...] = ((cos_final + 1.0) * 0.5).astype(y_ref.dtype)


def _plan_tiles(B, F, itemsize):
    """Choose (mode, feature_tile, batch_tile) within the per-step VMEM budget."""
    per_elem = 4 * itemsize + 6 * 4          # 2x double-buffered x/y tiles + ~6 f32 temporaries
    f_lanes = ((F + _LANE - 1) // _LANE) * _LANE

    # Fused path: full batch resident per (B, TF) tile -> x read exactly once.
    tf_fused = (_VMEM_TILE_BUDGET // (B * per_elem)) // _LANE * _LANE
    tf_fused = min(tf_fused, _MAX_TF, f_lanes)
    if tf_fused >= f_lanes:
        return "fused", F, B                  # whole feature dim in one exact (non-ragged) tile
    if tf_fused >= _LANE:
        return "fused", int(tf_fused), B      # cdiv feature grid; only the last tile is ragged

    # Batch-tiled path (batch column too large for VMEM): two-phase training.
    tf = min(512, f_lanes, _MAX_TF)
    if tf >= F:
        tf = F                                # single exact feature tile
    tb = (_VMEM_TILE_BUDGET // (tf * per_elem)) // _SUBLANE * _SUBLANE
    tb = max(tb, _SUBLANE)
    return "tiled", int(tf), int(tb)


def qc_norm_correction(x, x_running_rot, momentum=0.1, training=True, plan=None):
    """Forward pass of QC_Norm_Correction.

    x:             (B, F) array with values in [0, 1] (any float dtype)
    x_running_rot: (F,)   running rotation buffer (zeros at init)
    Returns (y, new_x_running_rot); eval mode leaves the running stat unchanged.
    `plan` is a testing hook: ("fused"|"tiled", feature_tile, batch_tile).
    """
    B, F = x.shape
    mode, tf, tb = plan if plan is not None else _plan_tiles(B, F, x.dtype.itemsize)
    n_f = pl.cdiv(F, tf)
    n_b = pl.cdiv(B, tb)

    if training:
        if mode == "fused":
            y, mean2d = pl.pallas_call(
                _train_fused_kernel,
                grid=(n_f,),
                in_specs=[pl.BlockSpec((B, tf), lambda i: (0, i))],
                out_specs=[pl.BlockSpec((B, tf), lambda i: (0, i)),
                           pl.BlockSpec((1, tf), lambda i: (0, i))],
                out_shape=(jax.ShapeDtypeStruct((B, F), x.dtype),
                           jax.ShapeDtypeStruct((1, F), jnp.float32)),
                compiler_params=pltpu.CompilerParams(
                    dimension_semantics=("parallel",),
                    vmem_limit_bytes=_VMEM_LIMIT),
            )(x)
        else:
            mean2d = pl.pallas_call(
                functools.partial(_mean_kernel, batch_size=B, batch_tile=tb),
                grid=(n_f, n_b),
                in_specs=[pl.BlockSpec((tb, tf), lambda i, j: (j, i))],
                out_specs=pl.BlockSpec((1, tf), lambda i, j: (0, i)),
                out_shape=jax.ShapeDtypeStruct((1, F), jnp.float32),
                compiler_params=pltpu.CompilerParams(
                    dimension_semantics=("parallel", "arbitrary"),
                    vmem_limit_bytes=_VMEM_LIMIT),
            )(x)
            y = pl.pallas_call(
                _apply_train_kernel,
                grid=(n_f, n_b),
                in_specs=[pl.BlockSpec((tb, tf), lambda i, j: (j, i)),
                          pl.BlockSpec((1, tf), lambda i, j: (0, i))],
                out_specs=pl.BlockSpec((tb, tf), lambda i, j: (j, i)),
                out_shape=jax.ShapeDtypeStruct((B, F), x.dtype),
                compiler_params=pltpu.CompilerParams(
                    dimension_semantics=("parallel", "parallel"),
                    vmem_limit_bytes=_VMEM_LIMIT),
            )(x, mean2d)
        mean = mean2d[0]
        # (F,)-sized running-stat update (arcsin + EMA): plain-JAX glue, negligible.
        # pi/2 - arccos(2*mean - 1) == arcsin(2*mean - 1)
        x_moving_rot = jnp.arcsin(jnp.clip(2.0 * mean - 1.0, -1.0, 1.0))
        new_rot = (momentum * x_running_rot.astype(jnp.float32)
                   + (1.0 - momentum) * x_moving_rot)
        return y, new_rot.astype(x_running_rot.dtype)

    # Eval branch: cos/sin of the (F,)-sized rotation hoisted to the wrapper.
    rot = x_running_rot.astype(jnp.float32)
    cr = jnp.cos(rot).reshape(1, F)
    sr = jnp.sin(rot).reshape(1, F)
    y = pl.pallas_call(
        _eval_kernel,
        grid=(n_f, n_b),
        in_specs=[pl.BlockSpec((tb, tf), lambda i, j: (j, i)),
                  pl.BlockSpec((1, tf), lambda i, j: (0, i)),
                  pl.BlockSpec((1, tf), lambda i, j: (0, i))],
        out_specs=pl.BlockSpec((tb, tf), lambda i, j: (j, i)),
        out_shape=jax.ShapeDtypeStruct((B, F), x.dtype),
        compiler_params=pltpu.CompilerParams(
            dimension_semantics=("parallel", "parallel"),
            vmem_limit_bytes=_VMEM_LIMIT),
    )(x, cr, sr)
    return y, x_running_rot


def _ref_forward(x, running_rot, momentum, training):
    """NumPy reference transcribing the PyTorch module literally (arccos form)."""
    x = np.asarray(x, np.float64).T                       # (F, B), like torch transpose(0,1)
    running_rot = np.asarray(running_rot, np.float64)
    if training:
        x_sum = np.broadcast_to(x.sum(-1, keepdims=True), x.shape)
        x_mean = x_sum / x.shape[-1]
        x_mean_ancle = np.arccos(np.clip(x_mean * 2.0 - 1.0, -1.0, 1.0))
        x_mean_rote = np.pi / 2.0 - x_mean_ancle
        x_moving_rot = x_mean_rote.sum(-1) / x.shape[-1]
        new_rot = momentum * running_rot + (1.0 - momentum) * x_moving_rot
        x_ancle = np.arccos(np.clip(x * 2.0 - 1.0, -1.0, 1.0))
        x_final = x_ancle + x_mean_rote
        y = (np.cos(x_final) + 1.0) / 2.0
        return y.T, new_rot
    else:
        x_ancle = np.arccos(np.clip(x * 2.0 - 1.0, -1.0, 1.0))
        x_final = x_ancle + running_rot[:, None]
        y = (np.cos(x_final) + 1.0) / 2.0
        return y.T, running_rot


def _check_case(key, B, F, momentum=0.1, plan=None):
    x = jax.random.uniform(key, (B, F), jnp.float32, minval=0.02, maxval=0.98)
    rot0 = jnp.zeros((F,), jnp.float32)                   # Parameter init: torch.zeros(num_features)

    # training=True branch (the module's default)
    y_tr, new_rot = qc_norm_correction(x, rot0, momentum, training=True, plan=plan)
    y_tr, new_rot = jax.block_until_ready((y_tr, new_rot))

    # training=False branch, using the updated running stat
    y_ev, _ = qc_norm_correction(x, new_rot, momentum, training=False, plan=plan)
    y_ev = jax.block_until_ready(y_ev)

    ref_y_tr, ref_rot = _ref_forward(np.array(x), np.zeros(F), momentum, True)
    ref_y_ev, _ = _ref_forward(np.array(x), np.array(new_rot), momentum, False)
    assert np.allclose(np.array(y_tr), ref_y_tr, atol=1e-4), "training-branch mismatch"
    assert np.allclose(np.array(new_rot), ref_rot, atol=1e-4), "running-rot mismatch"
    assert np.allclose(np.array(y_ev), ref_y_ev, atol=1e-4), "eval-branch mismatch"


if __name__ == "__main__":
    key = jax.random.PRNGKey(0)
    k1, k2, k3 = jax.random.split(key, 3)

    # MNIST-like shape from the original test: single exact fused tile, grid=(1,).
    _check_case(k1, B=8, F=32)
    # Ragged feature dim (600): fused single exact tile, no pad/concat/slice passes.
    _check_case(k2, B=16, F=600)
    # Force the large-batch two-phase path (batch-tiled, ragged batch tail masked).
    _check_case(k3, B=20, F=256, plan=("tiled", 128, 8))

    print("KERNEL_OK")
</pallas_src>

<mosaic_0001>
module attributes {stable_mosaic.version = 11 : i64} {
  func.func @_train_fused_kernel(%arg0: i32, %arg1: memref<8x32xf32, #tpu.memory_space<vmem>>, %arg2: memref<8x32xf32, #tpu.memory_space<vmem>>, %arg3: memref<1x32xf32, #tpu.memory_space<vmem>>) attributes {dimension_semantics = [#tpu.dimension_semantics<parallel>], iteration_bounds = array<i64: 1>, scalar_prefetch = 0 : i64, scratch_operands = 0 : i64, tpu.core_type = #tpu.core_type<tc>, window_params = [{transform_indices = @transform_0, window_bounds = array<i64: 8, 32>}, {transform_indices = @transform_1, window_bounds = array<i64: 8, 32>}, {transform_indices = @transform_2, window_bounds = array<i64: 1, 32>}]} {
    %c0 = arith.constant 0 : index
    %c0_0 = arith.constant 0 : index
    %0 = vector.load %arg1[%c0, %c0_0] : memref<8x32xf32, #tpu.memory_space<vmem>>, vector<8x32xf32>
    %cst = arith.constant dense<0.000000e+00> : vector<32xf32>
    %1 = vector.multi_reduction <add>, %0, %cst [0] : vector<8x32xf32> to vector<32xf32>
    %2 = vector.shape_cast %1 : vector<32xf32> to vector<1x32xf32>
    %cst_1 = arith.constant 1.250000e-01 : f32
    %3 = vector.broadcast %cst_1 : f32 to vector<1x32xf32>
    %4 = arith.mulf %2, %3 : vector<1x32xf32>
    %c0_2 = arith.constant 0 : index
    %c0_3 = arith.constant 0 : index
    %5 = vector.load %arg3[%c0_2, %c0_3] : memref<1x32xf32, #tpu.memory_space<vmem>>, vector<1x32xf32>
    tpu.vector_store %arg3[%c0_2, %c0_3], %4 {strides = array<i32>} : memref<1x32xf32, #tpu.memory_space<vmem>>, vector<1x32xf32>,
    %cst_4 = arith.constant 2.000000e+00 : f32
    %6 = vector.broadcast %cst_4 : f32 to vector<8x32xf32>
    %7 = arith.mulf %6, %0 : vector<8x32xf32>
    %cst_5 = arith.constant 1.000000e+00 : f32
    %8 = vector.broadcast %cst_5 : f32 to vector<8x32xf32>
    %9 = arith.subf %7, %8 : vector<8x32xf32>
    %cst_6 = arith.constant -1.000000e+00 : f32
    %cst_7 = arith.constant 1.000000e+00 : f32
    %10 = vector.broadcast %cst_6 : f32 to vector<8x32xf32>
    %11 = arith.maximumf %10, %9 : vector<8x32xf32>
    %12 = vector.broadcast %cst_7 : f32 to vector<8x32xf32>
    %13 = arith.minimumf %12, %11 : vector<8x32xf32>
    %cst_8 = arith.constant 2.000000e+00 : f32
    %14 = vector.broadcast %cst_8 : f32 to vector<1x32xf32>
    %15 = arith.mulf %14, %4 : vector<1x32xf32>
    %cst_9 = arith.constant 1.000000e+00 : f32
    %16 = vector.broadcast %cst_9 : f32 to vector<1x32xf32>
    %17 = arith.subf %15, %16 : vector<1x32xf32>
    %cst_10 = arith.constant -1.000000e+00 : f32
    %cst_11 = arith.constant 1.000000e+00 : f32
    %18 = vector.broadcast %cst_10 : f32 to vector<1x32xf32>
    %19 = arith.maximumf %18, %17 : vector<1x32xf32>
    %20 = vector.broadcast %cst_11 : f32 to vector<1x32xf32>
    %21 = arith.minimumf %20, %19 : vector<1x32xf32>
    %22 = arith.mulf %21, %21 : vector<1x32xf32>
    %cst_12 = arith.constant 1.000000e+00 : f32
    %23 = vector.broadcast %cst_12 : f32 to vector<1x32xf32>
    %24 = arith.subf %23, %22 : vector<1x32xf32>
    %cst_13 = arith.constant 0.000000e+00 : f32
    %25 = vector.broadcast %cst_13 : f32 to vector<1x32xf32>
    %26 = arith.maximumf %24, %25 : vector<1x32xf32>
    %27 = math.sqrt %26 : vector<1x32xf32>
    %28 = arith.mulf %13, %13 : vector<8x32xf32>
    %cst_14 = arith.constant 1.000000e+00 : f32
    %29 = vector.broadcast %cst_14 : f32 to vector<8x32xf32>
    %30 = arith.subf %29, %28 : vector<8x32xf32>
    %cst_15 = arith.constant 0.000000e+00 : f32
    %31 = vector.broadcast %cst_15 : f32 to vector<8x32xf32>
    %32 = arith.maximumf %30, %31 : vector<8x32xf32>
    %33 = math.sqrt %32 : vector<8x32xf32>
    %34 = vector.broadcast %27 : vector<1x32xf32> to vector<8x32xf32>
    %35 = arith.mulf %13, %34 : vector<8x32xf32>
    %36 = vector.broadcast %21 : vector<1x32xf32> to vector<8x32xf32>
    %37 = arith.mulf %33, %36 : vector<8x32xf32>
    %38 = arith.subf %35, %37 : vector<8x32xf32>
    %cst_16 = arith.constant 1.000000e+00 : f32
    %39 = vector.broadcast %cst_16 : f32 to vector<8x32xf32>
    %40 = arith.addf %38, %39 : vector<8x32xf32>
    %cst_17 = arith.constant 5.000000e-01 : f32
    %41 = vector.broadcast %cst_17 : f32 to vector<8x32xf32>
    %42 = arith.mulf %40, %41 : vector<8x32xf32>
    %c0_18 = arith.constant 0 : index
    %c0_19 = arith.constant 0 : index
    %43 = vector.load %arg2[%c0_18, %c0_19] : memref<8x32xf32, #tpu.memory_space<vmem>>, vector<8x32xf32>
    tpu.vector_store %arg2[%c0_18, %c0_19], %42 {strides = array<i32>} : memref<8x32xf32, #tpu.memory_space<vmem>>, vector<8x32xf32>,
    return
  }
  func.func @transform_0(%arg0: i32) -> (i32, i32) {
    %c0_i32 = arith.constant 0 : i32
    %c0_i32_0 = arith.constant 0 : i32
    return %c0_i32, %arg0 : i32, i32
  }
  func.func @transform_1(%arg0: i32) -> (i32, i32) {
    %c0_i32 = arith.constant 0 : i32
    %c0_i32_0 = arith.constant 0 : i32
    return %c0_i32, %arg0 : i32, i32
  }
  func.func @transform_2(%arg0: i32) -> (i32, i32) {
    %c0_i32 = arith.constant 0 : i32
    %c0_i32_0 = arith.constant 0 : i32
    return %c0_i32, %arg0 : i32, i32
  }
}

</mosaic_0001>

<llo_original>
// kernel: tpu_custom_call.1
$region0: #{tpu_custom_call.1}
  #allocation0 [shape = 'u32[]', space=smem, size = 0x4, offset = 0x4, fixed_abs, tag = 'smem constant byte address 0x4 - core index']
  #allocation1 [shape = 'u32[72,128]{1,0:T(1,128)}', space=vmem, size = 0x9000, scoped, tag = 'internal scratch']
  %s0 = inlined_call_operand.hbm [shape: f32[8,32], index: 0, kind: input, shape index: {}]
  %s1 = inlined_call_operand.hbm [shape: f32[8,32], index: 1, kind: output, shape index: {0}]
  %s2 = inlined_call_operand.hbm [shape: f32[1,32], index: 2, kind: output, shape index: {1}]
  %3 = xla_tuple %s1, %s2
  %s4 = sld [smem:[#allocation0]]
  $region26: #{tpu_custom_call.1} parent=0
    _
  %s6 = ssub.s32 1, %s4
  %s7 = scalar_select 0, %s6, %s4
  $region1: #{tpu_custom_call.1} parent=0
    #allocation2 [shape = 'u8[4096]{0}', space=vmem, size = 0x1000, scoped, tag = 'input window, operand 0, single buffered']
    #allocation3 [shape = 's32[1]{0}', space=sflag, size = 0x4, scoped, tag = 'scoped memory for tpu_custom_call.1']
    #allocation4 [shape = 's32[1]{0}', space=sflag, size = 0x4, scoped, tag = 'scoped memory for tpu_custom_call.1']
    #allocation5 [shape = 'u8[4096]{0}', space=vmem, size = 0x1000, scoped, tag = 'output window, operand 0, single buffered']
    #allocation6 [shape = 'u8[512]{0}', space=vmem, size = 0x400, scoped, tag = 'output window, operand 1, single buffered']
    #allocation7 [shape = 's32[1]{0}', space=sflag, size = 0x4, scoped, tag = 'scoped memory for tpu_custom_call.1']
    %8 = vsyncpa [#allocation3], 0
    %9 = vsyncpa [#allocation4], 0
    %10 = vsyncpa [#allocation7], 0
    // Predicated region
    $region2: #{tpu_custom_call.1} parent=1 // pred_check
      _
    $region3: #{tpu_custom_call.1} parent=1 // pred_check_branch
      %12 = sbr.rel (0) target = $region5
    $region4: #{tpu_custom_call.1} parent=1 // pred_region
      %14 = vsyncadd [#allocation3], 0
      %s16 = sshll.u32 %s0, 4
      %s17 = int_to_ptr.hbm [resolvable:$true] %s16
      %s18 = sshll.u32 [#allocation2], 4
      %s19 = int_to_ptr.vmem [resolvable:$true] %s18
      %21 = dma.hbm_to_vmem [thread:$0]  %s17, 128, %s19, [#allocation3]
    $region5: #{tpu_custom_call.1} parent=1 // pred_fallthru
      _
    // Predicated region
    $region6: #{tpu_custom_call.1} parent=1 // pred_check
      _
    $region7: #{tpu_custom_call.1} parent=1 // pred_check_branch
      %23 = sbr.rel (0) target = $region9
    $region8: #{tpu_custom_call.1} parent=1 // pred_region
      %25 = dma.done [#allocation3], 128
    $region9: #{tpu_custom_call.1} parent=1 // pred_fallthru
      _
    %v26 = vld [vmem:[#allocation2] sm:$0xff]
    %vm27 = vcmask 261120
    %v28 = vsel %vm27, %v26, 0.0
    %v29 = vrot.slane %v28, 4
    %v30 = vadd.f32 %v28, %v29
    %v31 = vrot.slane %v30, 2
    %v32 = vadd.f32 %v30, %v31
    %v33 = vrot.slane %v32, 1
    %v34 = vadd.f32 %v32, %v33
    %v35 = vmul.f32 %v34, 0.125
    %vm36 = vcmask 253952
    %37 = vst.msk [vmem:[#allocation6] sm:$0x1] %vm36, %v35
    %v38 = vmul.f32 %v26, 2.0
    %v39 = vsub.f32 %v38, 1.0
    %v40 = vmax.f32 %v39, -1.0
    %v41 = vmin.f32 %v40, 1.0
    %v42 = vmul.f32 %v35, 2.0
    %v43 = vsub.f32 %v42, 1.0
    %v44 = vmax.f32 %v43, -1.0
    %v45 = vmin.f32 %v44, 1.0
    %v46 = vmul.f32 %v45, %v45
    %v47 = vsub.f32 1.0, %v46
    %v48 = vmax.f32 %v47, 0.0
    %v49 = vrsqrt.pop %v48
    %v50 = vmul.f32 %v49, %v48
    %v51 = vmul.f32 %v50, %v49
    %v52 = vmul.f32 0.5, %v51
    %v53 = vsub.f32 1.5, %v52
    %v54 = vmul.f32 %v49, %v53
    %v55 = vmul.f32 %v48, %v54
    %vm56 = vcmp.eq.f32.partialorder %v48, inf
    %v57 = vsel %vm56, %v48, %v55
    %vm58 = vcmp.eq.f32.partialorder %v48, 0.0
    %v59 = vand.u32 %v48, 2147483648
    %v60 = vsel %vm58, %v59, %v57
    %v61 = vmul.f32 %v41, %v41
    %v62 = vsub.f32 1.0, %v61
    %v63 = vmax.f32 %v62, 0.0
    %v64 = vrsqrt.pop %v63
    %v65 = vmul.f32 %v64, %v63
    %v66 = vmul.f32 %v65, %v64
    %v67 = vmul.f32 0.5, %v66
    %v68 = vsub.f32 1.5, %v67
    %v69 = vmul.f32 %v64, %v68
    %v70 = vmul.f32 %v63, %v69
    %vm71 = vcmp.eq.f32.partialorder %v63, inf
    %v72 = vsel %vm71, %v63, %v70
    %vm73 = vcmp.eq.f32.partialorder %v63, 0.0
    %v74 = vand.u32 %v63, 2147483648
    %v75 = vsel %vm73, %v74, %v72
    %v76 = vmul.f32 %v41, %v60
    %v77 = vmul.f32 %v75, %v45
    %v78 = vsub.f32 %v76, %v77
    %v79 = vadd.f32 %v78, 1.0
    %v80 = vmul.f32 %v79, 0.5
    %81 = vst.msk [vmem:[#allocation5] sm:$0xff] %vm27, %v80
    // Predicated region
    $region10: #{tpu_custom_call.1} parent=1 // pred_check
      _
    $region11: #{tpu_custom_call.1} parent=1 // pred_check_branch
      %83 = sbr.rel (0) target = $region13
    $region12: #{tpu_custom_call.1} parent=1 // pred_region
      %85 = vsyncadd [#allocation4], 0
      %s87 = sshll.u32 [#allocation5], 4
      %s88 = int_to_ptr.vmem [resolvable:$true] %s87
      %s89 = sshll.u32 %s1, 4
      %s90 = int_to_ptr.hbm [resolvable:$true] %s89
      %92 = dma.vmem_to_hbm [thread:$0]  %s88, 128, %s90, [#allocation4]
    $region13: #{tpu_custom_call.1} parent=1 // pred_fallthru
      _
    // Predicated region
    $region14: #{tpu_custom_call.1} parent=1 // pred_check
      _
    $region15: #{tpu_custom_call.1} parent=1 // pred_check_branch
      %94 = sbr.rel (0) target = $region17
    $region16: #{tpu_custom_call.1} parent=1 // pred_region
      %96 = vsyncadd [#allocation7], 0
      %s98 = sshll.u32 [#allocation6], 4
      %s99 = int_to_ptr.vmem [resolvable:$true] %s98
      %s100 = sshll.u32 %s2, 4
      %s101 = int_to_ptr.hbm [resolvable:$true] %s100
      %103 = dma.vmem_to_hbm [thread:$0]  %s99, 16, %s101, [#allocation7]
    $region17: #{tpu_custom_call.1} parent=1 // pred_fallthru
      _
    // Predicated region
    $region18: #{tpu_custom_call.1} parent=1 // pred_check
      _
    $region19: #{tpu_custom_call.1} parent=1 // pred_check_branch
      %105 = sbr.rel (0) target = $region21
    $region20: #{tpu_custom_call.1} parent=1 // pred_region
      %107 = dma.done [#allocation4], 128
    $region21: #{tpu_custom_call.1} parent=1 // pred_fallthru
      _
    // Predicated region
    $region22: #{tpu_custom_call.1} parent=1 // pred_check
      _
    $region23: #{tpu_custom_call.1} parent=1 // pred_check_branch
      %109 = sbr.rel (0) target = $region25
    $region24: #{tpu_custom_call.1} parent=1 // pred_region
      %111 = dma.done [#allocation7], 16
    $region25: #{tpu_custom_call.1} parent=1 // pred_fallthru
      _
    %112 = vsyncpa [#allocation3], 1
    %113 = vsyncpa [#allocation4], 1
    %114 = vsyncpa [#allocation7], 1

</llo_original>
